<compile_context>
chip_gen: v7x
topology: tpu7x:2x2x1
jax: 0.10.0
libtpu: 0.0.40
codegen_flags: <defaults>
</compile_context>

<pallas_src>
import jax
import jax.numpy as jnp
from jax import lax
from jax.experimental import pallas as pl
from jax.experimental.pallas import tpu as pltpu


def _round_up(x, m):
    return ((x + m - 1) // m) * m


def _vmem_capacity_bytes():
    """Physical VMEM of the local TPU, with a conservative (v7x-sized) fallback."""
    try:
        cap = getattr(pltpu.get_tpu_info(), "vmem_capacity_bytes", None)
        if cap:
            return int(cap)
    except Exception:
        pass
    return 64 * 1024 * 1024


def _lr_kernel(x_ref, w_ref, b_ref, o_ref):
    # x_ref: (TB, F) VMEM   w_ref: (1, F) VMEM   b_ref: (1,) SMEM   o_ref: (1, TB) VMEM
    #
    # "NT" contraction: both operands contract on their minor (F / lane) dim, the
    # MXU-friendly orientation used by the reference flash-attention q.k^T.  The
    # result is directly a lane-dense (1, TB) row, so the store is a full-width
    # vst and no transpose/relayout of the big (TB, F) tile's data is requested.
    # TODO(synk): confirm with pl.lower_as_mlir on hardware that Mosaic does not
    # materialize an XLU transpose of the (TB, F) tile for this orientation; if it
    # does, switch to x @ w^T -> (TB, 1) and relayout only the TB-element result.
    z = lax.dot_general(
        w_ref[...], x_ref[...],
        dimension_numbers=(((1,), (1,)), ((), ())),
        preferred_element_type=jnp.float32,
    )                                       # (1, TB)
    z = z + b_ref[0]                        # scalar bias from SMEM
    # sigmoid(z) = 1 / (1 + exp(-z)); exp and the approximate reciprocal both run
    # on the EUP slot, leaving the VPU / store slots free.
    o_ref[...] = pl.reciprocal(1.0 + jnp.exp(-z), approx=True).astype(o_ref.dtype)


def lr_forward(x, w, b, *, tb=None):
    """sigmoid(x @ w.T + b).  x: [B, F] f32, w: [1, F] f32 (torch layout), b: [1] f32 -> [B, 1]."""
    B, F = x.shape
    assert w.shape == (1, F) and b.shape == (1,)

    lane_f = _round_up(F, 128)                    # F pads to 128 lanes inside VMEM
    row_bytes = lane_f * x.dtype.itemsize         # VMEM bytes per x row (not HBM bytes)
    vmem_cap = _vmem_capacity_bytes()

    # Per-buffer budget for the double-buffered x tile: large enough to amortize
    # the ~0.35 us/step pipeline overhead, small enough that two buffers plus the
    # small weight/output buffers fit on every generation:
    #   v5e/v6e (128 MiB physical VMEM) -> 16   MiB per buffer
    #   v7x     ( 64 MiB physical VMEM) -> ~12.8 MiB per buffer
    x_buf_budget = min(16 * 1024 * 1024, vmem_cap // 5)
    if 128 * row_bytes > x_buf_budget:
        # TODO(synk): add a K-split grid axis + f32 accumulator for very large F
        # (tens of thousands of features) instead of a single (tb, F) block.
        raise NotImplementedError(
            f"n_features={F} needs a K-split kernel; a single (128, {F}) block "
            f"exceeds the per-buffer VMEM budget of {x_buf_budget} bytes."
        )

    if tb is None:
        tb = max(128, (x_buf_budget // row_bytes) // 128 * 128)
    tb = min(tb, _round_up(B, 128))               # never bigger than the (rounded) batch

    n_blocks = pl.cdiv(B, tb)
    if n_blocks > 1 and n_blocks % 2 == 1:
        # Keep the block count even so the "parallel" batch axis splits cleanly
        # across the two TensorCores of a v7x megacore.
        n_blocks += 1
        tb = max(128, _round_up(pl.cdiv(B, n_blocks), 128))
        n_blocks = pl.cdiv(B, tb)
    Bp = n_blocks * tb                            # only the tiny output is rounded up; x is NOT copied

    # Double-buffered VMEM footprint: x tiles + lane-dense output tiles + resident weight row.
    needed = 2 * tb * row_bytes + 2 * 8 * tb * 4 + 2 * 8 * lane_f * 4
    vmem_limit = int(min(max(needed + (4 << 20), 32 << 20), (vmem_cap * 3) // 4))

    cost = pl.CostEstimate(
        flops=2 * B * F,
        transcendentals=B,
        bytes_accessed=B * F * int(x.dtype.itemsize) + lane_f * 4 + 4 + Bp * 4,
    )

    out = pl.pallas_call(
        _lr_kernel,
        out_shape=jax.ShapeDtypeStruct((1, Bp), jnp.float32),
        grid_spec=pltpu.PrefetchScalarGridSpec(
            num_scalar_prefetch=0,
            grid=(n_blocks,),
            in_specs=[
                # x tile, auto double-buffered; the ragged last block's DMA is
                # masked by Pallas (no jnp.pad copy of x in HBM).
                pl.BlockSpec((tb, F), lambda i: (i, 0)),
                # weight row: same block every step -> stays resident in VMEM.
                pl.BlockSpec((1, F), lambda i: (0, 0)),
                # bias scalar on the scalar path.
                pl.BlockSpec(memory_space=pltpu.MemorySpace.SMEM),
            ],
            # lane-dense (1, tb) output blocks -> unmasked full-width stores.
            out_specs=pl.BlockSpec((1, tb), lambda i: (0, i)),
        ),
        compiler_params=pltpu.CompilerParams(
            dimension_semantics=("parallel",),    # batch axis -> both TCs on v7x
            vmem_limit_bytes=vmem_limit,
        ),
        cost_estimate=cost,
    )(x, w, b)

    # (1, Bp) -> (Bp, 1) is a free row-major reshape; drop the padded tail rows
    # (they only ever hold sigmoid(garbage) from the masked last x block).
    return out.reshape(Bp, 1)[:B]


if __name__ == "__main__":
    key = jax.random.PRNGKey(0)
    kx, kw, kb = jax.random.split(key, 3)

    B, n_features = 8, 32
    x = jax.random.normal(kx, (B, n_features), dtype=jnp.float32)

    # torch.nn.Linear(n_features, 1)-style init: U(-1/sqrt(F), 1/sqrt(F)),
    # weight kept in torch's [1, F] layout.
    bound = 1.0 / float(n_features) ** 0.5
    w = jax.random.uniform(kw, (1, n_features), jnp.float32, -bound, bound)
    b = jax.random.uniform(kb, (1,), jnp.float32, -bound, bound)

    out = jax.block_until_ready(lr_forward(x, w, b))

    # Reference: sigmoid(x @ W^T + b), matching torch.sigmoid(nn.Linear(F,1)(x)).
    ref = jax.nn.sigmoid(x @ w.T + b)
    assert out.shape == (B, 1)
    # Tolerance accounts for the EUP approximate reciprocal in the sigmoid.
    assert jnp.allclose(out, ref, atol=2e-3, rtol=2e-3), float(jnp.max(jnp.abs(out - ref)))
    print("KERNEL_OK")
</pallas_src>

<mosaic_0001>
module attributes {stable_mosaic.version = 11 : i64} {
  func.func @_lr_kernel(%arg0: i32, %arg1: memref<128x32xf32, #tpu.memory_space<vmem>>, %arg2: memref<1x32xf32, #tpu.memory_space<vmem>>, %arg3: memref<1xf32, #tpu.memory_space<smem>>, %arg4: memref<1x128xf32, #tpu.memory_space<vmem>>) attributes {dimension_semantics = [#tpu.dimension_semantics<parallel>], iteration_bounds = array<i64: 1>, scalar_prefetch = 0 : i64, scratch_operands = 0 : i64, tpu.core_type = #tpu.core_type<tc>, window_params = [{transform_indices = @transform_0, window_bounds = array<i64: 128, 32>}, {pipeline_mode = #tpu.pipeline_mode<synchronous>, transform_indices = @transform_1, window_bounds = array<i64: 1, 32>}, {transform_indices = @transform_2, window_bounds = array<i64: 1>}, {transform_indices = @transform_3, window_bounds = array<i64: 1, 128>}]} {
    %c0 = arith.constant 0 : index
    %c0_0 = arith.constant 0 : index
    %0 = vector.load %arg2[%c0, %c0_0] : memref<1x32xf32, #tpu.memory_space<vmem>>, vector<1x32xf32>
    %c0_1 = arith.constant 0 : index
    %c0_2 = arith.constant 0 : index
    %1 = vector.load %arg1[%c0_1, %c0_2] : memref<128x32xf32, #tpu.memory_space<vmem>>, vector<128x32xf32>
    %cst = arith.constant dense<0.000000e+00> : vector<1x128xf32>
    %2 = tpu.matmul %0, %1, %cst {dimension_numbers = #tpu.dot_dimension_numbers<[1], [1], [0], [0], [0, 0, 1, 0], [], []>} : vector<1x32xf32>, vector<128x32xf32>, vector<1x128xf32> -> vector<1x128xf32>
    %c0_3 = arith.constant 0 : index
    %3 = memref.load %arg3[%c0_3] : memref<1xf32, #tpu.memory_space<smem>>
    %4 = vector.broadcast %3 : f32 to vector<1x128xf32>
    %5 = arith.addf %2, %4 : vector<1x128xf32>
    %cst_4 = arith.constant 0.000000e+00 : f32
    %6 = vector.broadcast %cst_4 : f32 to vector<1x128xf32>
    %7 = arith.subf %6, %5 : vector<1x128xf32>
    %8 = math.exp %7 : vector<1x128xf32>
    %cst_5 = arith.constant 1.000000e+00 : f32
    %9 = vector.broadcast %cst_5 : f32 to vector<1x128xf32>
    %10 = arith.addf %9, %8 : vector<1x128xf32>
    %11 = tpu.reciprocal %10 {approx = true} : vector<1x128xf32> -> vector<1x128xf32>
    %c0_6 = arith.constant 0 : index
    %c0_7 = arith.constant 0 : index
    %12 = vector.load %arg4[%c0_6, %c0_7] : memref<1x128xf32, #tpu.memory_space<vmem>>, vector<1x128xf32>
    tpu.vector_store %arg4[%c0_6, %c0_7], %11 {strides = array<i32>} : memref<1x128xf32, #tpu.memory_space<vmem>>, vector<1x128xf32>,
    return
  }
  func.func @transform_0(%arg0: i32) -> (i32, i32) {
    %c0_i32 = arith.constant 0 : i32
    %c0_i32_0 = arith.constant 0 : i32
    return %arg0, %c0_i32 : i32, i32
  }
  func.func @transform_1(%arg0: i32) -> (i32, i32) {
    %c0_i32 = arith.constant 0 : i32
    %c0_i32_0 = arith.constant 0 : i32
    %c0_i32_1 = arith.constant 0 : i32
    return %c0_i32, %c0_i32_0 : i32, i32
  }
  func.func @transform_2(%arg0: i32) -> i32 {
    %c0_i32 = arith.constant 0 : i32
    %c0_i32_0 = arith.constant 0 : i32
    return %c0_i32 : i32
  }
  func.func @transform_3(%arg0: i32) -> (i32, i32) {
    %c0_i32 = arith.constant 0 : i32
    %c0_i32_0 = arith.constant 0 : i32
    return %c0_i32, %arg0 : i32, i32
  }
}

</mosaic_0001>

<llo_original>
// kernel: tpu_custom_call.1
$region0: #{tpu_custom_call.1}
  #allocation0 [shape = 'u32[]', space=smem, size = 0x4, offset = 0x4, fixed_abs, tag = 'smem constant byte address 0x4 - core index']
  #allocation1 [shape = 'u32[144,128]{1,0:T(1,128)}', space=vmem, size = 0x12000, scoped, tag = 'internal scratch']
  #allocation2 [shape = 'f32[1]{0:T(128)S(6)}', space=smem, size = 0x200, scoped, tag = 'scoped memory for tpu_custom_call.1']
  %s0 = inlined_call_operand.hbm [shape: f32[8,32], index: 0, kind: input, shape index: {}]
  %s1 = inlined_call_operand.vmem [shape: f32[1,32], index: 1, kind: input, shape index: {}]
  %s2 = inlined_call_operand.<no memory space> [shape: f32[1], index: 2, kind: input, shape index: {}]
  %s3 = inlined_call_operand.hbm [shape: f32[1,128], index: 3, kind: output, shape index: {}]
  %s4 = sld [smem:[#allocation0]]
  $region26: #{tpu_custom_call.1} parent=0
    _
  %s6 = ssub.s32 1, %s4
  %s7 = scalar_select 0, %s6, %s4
  %8 = sst [smem:[#allocation2]] %s2
  $region1: #{tpu_custom_call.1} parent=0
    #allocation3 [shape = 'u8[65536]{0}', space=vmem, size = 0x10000, scoped, tag = 'input window, operand 0, single buffered']
    #allocation4 [shape = 's32[1]{0}', space=sflag, size = 0x4, scoped, tag = 'scoped memory for tpu_custom_call.1']
    #allocation5 [shape = 's32[1]{0}', space=sflag, size = 0x4, scoped, tag = 'scoped memory for tpu_custom_call.1']
    #allocation6 [shape = 'u8[512]{0}', space=vmem, size = 0x400, scoped, tag = 'output window, operand 0, single buffered']
    %9 = vsyncpa [#allocation4], 0
    %10 = vsyncpa [#allocation5], 0
    // Predicated region
    $region2: #{tpu_custom_call.1} parent=1 // pred_check
      _
    $region3: #{tpu_custom_call.1} parent=1 // pred_check_branch
      %12 = sbr.rel (0) target = $region5
    $region4: #{tpu_custom_call.1} parent=1 // pred_region
      %s14 = ssub.s32 2048, 128
      %15 = vsyncadd [#allocation4], %s14
      %s16 = sshll.u32 [#allocation3], 4
      %s17 = int_to_ptr.vmem [resolvable:$true] %s16
      %22 = dma.hbm_to_vmem [thread:$0]  %s0, 128, %s17, [#allocation4], 128, 128, 8
    $region5: #{tpu_custom_call.1} parent=1 // pred_fallthru
      _
    // Predicated region
    $region6: #{tpu_custom_call.1} parent=1 // pred_check
      _
    $region7: #{tpu_custom_call.1} parent=1 // pred_check_branch
      %24 = sbr.rel (0) target = $region9
    $region8: #{tpu_custom_call.1} parent=1 // pred_region
      _
    $region9: #{tpu_custom_call.1} parent=1 // pred_fallthru
      _
    // Predicated region
    $region10: #{tpu_custom_call.1} parent=1 // pred_check
      _
    $region11: #{tpu_custom_call.1} parent=1 // pred_check_branch
      %26 = sbr.rel (0) target = $region13
    $region12: #{tpu_custom_call.1} parent=1 // pred_region
      _
    $region13: #{tpu_custom_call.1} parent=1 // pred_fallthru
      _
    // Predicated region
    $region14: #{tpu_custom_call.1} parent=1 // pred_check
      _
    $region15: #{tpu_custom_call.1} parent=1 // pred_check_branch
      %28 = sbr.rel (0) target = $region17
    $region16: #{tpu_custom_call.1} parent=1 // pred_region
      %29 = dma.done [#allocation4], 2048
    $region17: #{tpu_custom_call.1} parent=1 // pred_fallthru
      _
    %v30 = vld [vmem:[%s1] sm:$0x1]
    %v31 = vld [vmem:[#allocation3] sm:$0xff]
    %v32 = vld [vmem:[#allocation3 + $0x8] sm:$0xff]
    %v33 = vld [vmem:[#allocation3 + $0x10] sm:$0xff]
    %v34 = vld [vmem:[#allocation3 + $0x18] sm:$0xff]
    %v35 = vld [vmem:[#allocation3 + $0x20] sm:$0xff]
    %v36 = vld [vmem:[#allocation3 + $0x28] sm:$0xff]
    %v37 = vld [vmem:[#allocation3 + $0x30] sm:$0xff]
    %v38 = vld [vmem:[#allocation3 + $0x38] sm:$0xff]
    %v39 = vld [vmem:[#allocation3 + $0x40] sm:$0xff]
    %v40 = vld [vmem:[#allocation3 + $0x48] sm:$0xff]
    %v41 = vld [vmem:[#allocation3 + $0x50] sm:$0xff]
    %v42 = vld [vmem:[#allocation3 + $0x58] sm:$0xff]
    %v43 = vld [vmem:[#allocation3 + $0x60] sm:$0xff]
    %v44 = vld [vmem:[#allocation3 + $0x68] sm:$0xff]
    %v45 = vld [vmem:[#allocation3 + $0x70] sm:$0xff]
    %v46 = vld [vmem:[#allocation3 + $0x78] sm:$0xff]
    %s47 = sld [smem:[#allocation2]]
    %v48 = vstv %s47
    %vm49 = vcmask 261120
    %v51 = vsel %vm49, %v30, 0
    %v54 = vsel %vm49, %v31, 0
    %v57 = vsel %vm49, %v32, 0
    %v60 = vsel %vm49, %v33, 0
    %v63 = vsel %vm49, %v34, 0
    %v66 = vsel %vm49, %v35, 0
    %v69 = vsel %vm49, %v36, 0
    %v72 = vsel %vm49, %v37, 0
    %v75 = vsel %vm49, %v38, 0
    %v78 = vsel %vm49, %v39, 0
    %v81 = vsel %vm49, %v40, 0
    %v84 = vsel %vm49, %v41, 0
    %v87 = vsel %vm49, %v42, 0
    %v90 = vsel %vm49, %v43, 0
    %v93 = vsel %vm49, %v44, 0
    %v96 = vsel %vm49, %v45, 0
    %v99 = vsel %vm49, %v46, 0
    %101 = vmatprep.subr.mxu0 0.0
    %102 = vmatpush1.xpose.msra.mxu0 %v54
    %103 = vmatprep.subr.mxu0 0.0
    %104 = vmatpush1.xpose.msra.mxu0 %v57
    %105 = vmatprep.subr.mxu0 0.0
    %106 = vmatpush1.xpose.msra.mxu0 %v60
    %107 = vmatprep.subr.mxu0 0.0
    %108 = vmatpush1.xpose.msra.mxu0 %v63
    %109 = vmatprep.subr.mxu0 0.0
    %110 = vmatpush1.xpose.msra.mxu0 %v66
    %111 = vmatprep.subr.mxu0 0.0
    %112 = vmatpush1.xpose.msra.mxu0 %v69
    %113 = vmatprep.subr.mxu0 0.0
    %114 = vmatpush1.xpose.msra.mxu0 %v72
    %115 = vmatprep.subr.mxu0 0.0
    %116 = vmatpush1.xpose.msra.mxu0 %v75
    %117 = vmatprep.subr.mxu0 0.0
    %118 = vmatpush1.xpose.msra.mxu0 %v78
    %119 = vmatprep.subr.mxu0 0.0
    %120 = vmatpush1.xpose.msra.mxu0 %v81
    %121 = vmatprep.subr.mxu0 0.0
    %122 = vmatpush1.xpose.msra.mxu0 %v84
    %123 = vmatprep.subr.mxu0 0.0
    %124 = vmatpush1.xpose.msra.mxu0 %v87
    %125 = vmatprep.subr.mxu0 0.0
    %126 = vmatpush1.xpose.msra.mxu0 %v90
    %127 = vmatprep.subr.mxu0 0.0
    %128 = vmatpush1.xpose.msra.mxu0 %v93
    %129 = vmatprep.subr.mxu0 0.0
    %130 = vmatpush1.xpose.msra.mxu0 %v96
    %131 = vmatprep.subr.mxu0 0.0
    %132 = vmatpush1.xpose.msra.mxu0 %v99
    %133 = vmatprep.subr.mxu0 0.0
    %134 = vmatpush1.xpose.msra.mxu0 0.0
    %135 = vmatprep.subr.mxu0 0.0
    %136 = vmatpush1.xpose.msra.mxu0 0.0
    %137 = vmatprep.subr.mxu0 0.0
    %138 = vmatpush1.xpose.msra.mxu0 0.0
    %139 = vmatprep.subr.mxu0 0.0
    %140 = vmatpush1.xpose.msra.mxu0 0.0
    %141 = vmatprep.subr.mxu0 0.0
    %142 = vmatpush1.xpose.msra.mxu0 0.0
    %143 = vmatprep.subr.mxu0 0.0
    %144 = vmatpush1.xpose.msra.mxu0 0.0
    %145 = vmatprep.subr.mxu0 0.0
    %146 = vmatpush1.xpose.msra.mxu0 0.0
    %147 = vmatprep.subr.mxu0 0.0
    %148 = vmatpush1.xpose.msra.mxu0 0.0
    %149 = vmatprep.subr.mxu0 0.0
    %150 = vmatpush1.xpose.msra.mxu0 0.0
    %151 = vmatprep.subr.mxu0 0.0
    %152 = vmatpush1.xpose.msra.mxu0 0.0
    %153 = vmatprep.subr.mxu0 0.0
    %154 = vmatpush1.xpose.msra.mxu0 0.0
    %155 = vmatprep.subr.mxu0 0.0
    %156 = vmatpush1.xpose.msra.mxu0 0.0
    %157 = vmatprep.subr.mxu0 0.0
    %158 = vmatpush1.xpose.msra.mxu0 0.0
    %159 = vmatprep.subr.mxu0 0.0
    %160 = vmatpush1.xpose.msra.mxu0 0.0
    %161 = vmatprep.subr.mxu0 0.0
    %162 = vmatpush1.xpose.msra.mxu0 0.0
    %163 = vmatprep.subr.mxu0 0.0
    %164 = vmatpush1.xpose.msra.mxu0 0.0
    %165 = vmatprep.mubr.f32.mxu0 0.0
    %166 = vmatmul.mubr.f32.gmra.mrb[0].mxu0 %v51
    %v167 = vpop.f32.mrb[0].mxu0
    %v168 = vadd.f32 %v48, %v167
    %v169 = vpop.f32.mrb[0].mxu0
    %170 = vdwg.mxu0
    %v171 = vsub.f32 0.0, %v168
    %v172 = vmul.f32 %v171, 1.442695
    %v173 = vpow.pop %v172
    %v174 = vadd.f32 %v173, 1.0
    %v175 = vrcp.pop %v174
    %176 = vst [vmem:[#allocation6] sm:$0x1] %v175
    // Predicated region
    $region18: #{tpu_custom_call.1} parent=1 // pred_check
      _
    $region19: #{tpu_custom_call.1} parent=1 // pred_check_branch
      %178 = sbr.rel (0) target = $region21
    $region20: #{tpu_custom_call.1} parent=1 // pred_region
      %s180 = ssub.s32 16, 16
      %181 = vsyncadd [#allocation5], %s180
      %s183 = sshll.u32 [#allocation6], 4
      %s184 = int_to_ptr.vmem [resolvable:$true] %s183
      %186 = dma.vmem_to_hbm [thread:$0]  %s184, 16, %s3, [#allocation5]
    $region21: #{tpu_custom_call.1} parent=1 // pred_fallthru
      _
    // Predicated region
    $region22: #{tpu_custom_call.1} parent=1 // pred_check
      _
    $region23: #{tpu_custom_call.1} parent=1 // pred_check_branch
      %188 = sbr.rel (0) target = $region25
    $region24: #{tpu_custom_call.1} parent=1 // pred_region
      %189 = dma.done [#allocation5], 16
    $region25: #{tpu_custom_call.1} parent=1 // pred_fallthru
      _
    %190 = vsyncpa [#allocation4], 1
    %191 = vsyncpa [#allocation5], 1

</llo_original>
